<compile_context>
chip_gen: v6e
topology: v6e:2x2x1
jax: 0.10.0
libtpu: 0.0.40
codegen_flags: <defaults>
</compile_context>

<pallas_src>
import functools

import jax
import jax.numpy as jnp
from jax.experimental import pallas as pl
from jax.experimental.pallas import tpu as pltpu


# ----------------------------------------------------------------------------
# Model hyper-parameters (conv='gin', pool='add', as in EmbedModel defaults)
# ----------------------------------------------------------------------------
N_LAYERS = 2
INPUT_DIM = 8
HIDDEN_DIM = 32
OUTPUT_DIM = 16
LANE = 128  # output lane width (last dim of every weight / activation slab)

# TODO(synk): only the conv='gin', pool='add' branch of EmbedModel is
#             implemented; gcn/sage/gat convs and mean/max/sort/att/set pools
#             are not translated.


def _pad_to(a, shape):
    return jnp.pad(a, [(0, s - d) for d, s in zip(a.shape, shape)])


# ----------------------------------------------------------------------------
# Fused kernel
# ----------------------------------------------------------------------------
def embed_kernel(x_ref, adj_ref, pool_ref, w_ref, b_ref, out_ref, *,
                 n_layers, input_dim, hidden_dim):
    """EmbedModel forward.

    Weight slab (w_ref, (2 + 3*L + 1, HIDDEN, LANE) bf16, zero padded):
      [0]                 pre Linear(input_dim, hidden)   (real rows 0..input_dim)
      [1+2*l], [2+2*l]    layer l GIN-MLP Linear1 / Linear2
      [1+2*L + i]         post Linear1 chunk matching emb part i (i = 0..L)
      [2+3*L]             post Linear2
    Bias slab (b_ref, (8, LANE) f32, zero padded):
      [0] pre_b; [1+2*l],[2+2*l] layer biases; [1+2*L] post_b1; [2+2*L] post_b2
    """
    f32, bf16 = jnp.float32, jnp.bfloat16

    adj = adj_ref[...]        # (N, N) bf16 == A + I  (self-loop folded, exact ints)
    pool = pool_ref[...]      # (G, N) bf16 one-hot graph membership
    b = b_ref[...]            # (8, LANE) f32

    post1_base = 1 + 2 * n_layers            # first post-Linear1 chunk in w slab
    post_b1_i = 1 + 2 * n_layers
    post_b2_i = 2 + 2 * n_layers

    def pool_chunk(x32_bf, i):
        # Fused "global add pool + post Linear1 chunk i": (pool @ x) @ W1_i
        pooled = jnp.dot(pool, x32_bf, preferred_element_type=f32)          # (G, H)
        return jnp.dot(pooled.astype(bf16), w_ref[post1_base + i],
                       preferred_element_type=f32)                          # (G, LANE)

    # pre: Linear(input_dim, hidden) -- x_ref is the raw (N, input_dim) features.
    x = (jnp.dot(x_ref[...].astype(bf16), w_ref[0][:input_dim, :],
                 preferred_element_type=f32) + b[0:1, :])                   # (N, LANE)
    xres = x
    x32 = x[:, :hidden_dim].astype(bf16)
    acc = pool_chunk(x32, 0)          # emb part 0 pooled on the fly (no emb list)

    wi, bi = 1, 1
    for i in range(n_layers):
        # GINConv (eps=0): h = MLP((A + I) @ x); aggregation stays bf16 on MXU.
        h = jnp.dot(adj, x32, preferred_element_type=f32)                   # (N, H)
        h = jnp.maximum(
            jnp.dot(h.astype(bf16), w_ref[wi], preferred_element_type=f32)
            + b[bi:bi + 1, :], 0.0)                                         # (N, LANE)
        h = (jnp.dot(h[:, :hidden_dim].astype(bf16), w_ref[wi + 1],
                     preferred_element_type=f32) + b[bi + 1:bi + 2, :])     # (N, LANE)
        wi += 2
        bi += 2
        if i & 1:
            h = h + xres
            xres = h
        x = jnp.maximum(h, 0.0)
        x32 = x[:, :hidden_dim].astype(bf16)
        acc = acc + pool_chunk(x32, i + 1)     # emb part i+1 pooled immediately

    hidden = jnp.maximum(acc + b[post_b1_i:post_b1_i + 1, :], 0.0)          # (G, LANE)

    # post Linear2 -- lane-dense (G, 128) store; real 16 cols sliced outside.
    out_ref[...] = (
        jnp.dot(hidden[:, :hidden_dim].astype(bf16),
                w_ref[post1_base + n_layers + 1],
                preferred_element_type=f32) + b[post_b2_i:post_b2_i + 1, :])


# ----------------------------------------------------------------------------
# Operand packing (17 tensors -> 2 slabs) and wrapper
# ----------------------------------------------------------------------------
def _pack_params(params):
    n_layers = len(params["layers"])
    H = HIDDEN_DIM
    assert params["pre_w"].shape[0] <= H, "pre_w rows must fit the 32-row slab"
    pad_w = lambda w: _pad_to(w, (H, LANE))

    slabs = [pad_w(params["pre_w"])]
    for lp in params["layers"]:
        slabs += [pad_w(lp["w1"]), pad_w(lp["w2"])]
    for i in range(n_layers + 1):
        slabs.append(pad_w(params["post_w1"][i * H:(i + 1) * H, :]))
    slabs.append(pad_w(params["post_w2"]))
    # (2 + 3*L + 1, 32, 128) bf16 -- 8x smaller DMA than a (.., 128, 128) f32 slab.
    w_slab = jnp.stack(slabs, axis=0).astype(jnp.bfloat16)

    biases = [params["pre_b"]]
    for lp in params["layers"]:
        biases += [lp["b1"], lp["b2"]]
    biases += [params["post_b1"], params["post_b2"]]
    n_rows = ((len(biases) + 7) // 8) * 8
    b_slab = jnp.concatenate([_pad_to(bb, (1, LANE)) for bb in biases], axis=0)
    b_slab = _pad_to(b_slab, (n_rows, LANE)).astype(jnp.float32)
    return w_slab, b_slab


def embed_model_forward(x, adj, pool_mat, params):
    """One pallas_call for the whole EmbedModel forward.

    `adj` is the dense (N, N) adjacency A[dst, src] of the full multi-graph
    batch (block-diagonal across graphs) and `pool_mat` is the (G, N) one-hot
    graph-membership matrix -- so callers should batch many graphs per call
    (N >= 128 node rows) to amortize per-call overhead / weight DMA and fill
    the MXU rows.
    """
    n_nodes, input_dim = x.shape
    n_graphs = pool_mat.shape[0]
    n_layers = len(params["layers"])

    # Fold the GIN eps=0 self-loop into the adjacency once; keep it bf16
    # (exact while per-(dst,src) multi-edge counts stay <= 256).
    adj_hat = (adj + jnp.eye(n_nodes, dtype=adj.dtype)).astype(jnp.bfloat16)
    pool_bf = pool_mat.astype(jnp.bfloat16)     # 0/1 entries, exact in bf16
    x_f = x.astype(jnp.float32)                 # raw (N, input_dim); no HBM lane pad
    w_slab, b_slab = _pack_params(params)

    # Advisory cost estimate (padded-matmul flops; no transcendentals).
    H = HIDDEN_DIM
    flops = 2 * n_nodes * input_dim * LANE                                  # pre
    flops += n_layers * (2 * n_nodes * n_nodes * H + 2 * 2 * n_nodes * H * LANE)
    flops += (n_layers + 1) * (2 * n_graphs * n_nodes * H + 2 * n_graphs * H * LANE)
    flops += 2 * n_graphs * H * LANE                                        # post W2
    out_bytes = n_graphs * LANE * 4
    operand_bytes = sum(int(a.size) * a.dtype.itemsize
                        for a in (x_f, adj_hat, pool_bf, w_slab, b_slab))

    # VMEM budget from actual slab sizes plus activation headroom; cap at
    # 48 MiB so the same wrapper stays valid on v7x (64 MiB physical VMEM).
    act_bytes = 4 * n_nodes * LANE * 4
    vmem_limit = int(min(max(2 * (operand_bytes + out_bytes) + act_bytes + (1 << 20),
                             2 << 20), 48 << 20))

    vmem = pl.BlockSpec(memory_space=pltpu.MemorySpace.VMEM)
    out_pad = pl.pallas_call(
        functools.partial(embed_kernel, n_layers=n_layers,
                          input_dim=input_dim, hidden_dim=HIDDEN_DIM),
        out_shape=jax.ShapeDtypeStruct((n_graphs, LANE), jnp.float32),
        in_specs=[vmem] * 5,
        out_specs=vmem,
        compiler_params=pltpu.CompilerParams(vmem_limit_bytes=vmem_limit),
        cost_estimate=pl.CostEstimate(flops=int(flops), transcendentals=0,
                                      bytes_accessed=int(operand_bytes + out_bytes)),
    )(x_f, adj_hat, pool_bf, w_slab, b_slab)
    return out_pad[:, :OUTPUT_DIM]


# ----------------------------------------------------------------------------
# Pure-JAX f32 reference (same math, no Pallas) for the correctness check
# ----------------------------------------------------------------------------
def embed_model_reference(x, adj, pool_mat, params):
    x = x @ params["pre_w"] + params["pre_b"]
    emb = x
    xres = x
    for i, lp in enumerate(params["layers"]):
        h = x + adj @ x
        h = jnp.maximum(h @ lp["w1"] + lp["b1"], 0.0)
        h = h @ lp["w2"] + lp["b2"]
        if i & 1:
            h = h + xres
            xres = h
        x = jnp.maximum(h, 0.0)
        emb = jnp.concatenate([emb, x], axis=1)
    pooled = pool_mat @ emb
    hidden = jnp.maximum(pooled @ params["post_w1"] + params["post_b1"], 0.0)
    return hidden @ params["post_w2"] + params["post_b2"]


# ----------------------------------------------------------------------------
# Deterministic parameter / input construction
# ----------------------------------------------------------------------------
def init_params(key):
    ks = jax.random.split(key, 8 + 4 * N_LAYERS)
    ki = iter(ks)

    def lin(kin, in_d, out_d):
        return 0.1 * jax.random.normal(kin, (in_d, out_d), jnp.float32)

    params = {
        "pre_w": lin(next(ki), INPUT_DIM, HIDDEN_DIM),
        "pre_b": 0.1 * jax.random.normal(next(ki), (1, HIDDEN_DIM), jnp.float32),
        "layers": [],
        "post_w1": lin(next(ki), HIDDEN_DIM * (N_LAYERS + 1), HIDDEN_DIM),
        "post_b1": 0.1 * jax.random.normal(next(ki), (1, HIDDEN_DIM), jnp.float32),
        "post_w2": lin(next(ki), HIDDEN_DIM, OUTPUT_DIM),
        "post_b2": 0.1 * jax.random.normal(next(ki), (1, OUTPUT_DIM), jnp.float32),
    }
    for _ in range(N_LAYERS):
        params["layers"].append(
            {
                "w1": lin(next(ki), HIDDEN_DIM, HIDDEN_DIM),
                "b1": 0.1 * jax.random.normal(next(ki), (1, HIDDEN_DIM), jnp.float32),
                "w2": lin(next(ki), HIDDEN_DIM, HIDDEN_DIM),
                "b2": 0.1 * jax.random.normal(next(ki), (1, HIDDEN_DIM), jnp.float32),
            }
        )
    return params


if __name__ == "__main__":
    key = jax.random.PRNGKey(0)
    k_param, k_x, k_edge = jax.random.split(key, 3)

    n_nodes = 16
    n_edges = 40
    n_graphs = 2

    # Node features
    x = jax.random.normal(k_x, (n_nodes, INPUT_DIM), jnp.float32)

    # Random directed edges (edge_index layout: row 0 = src, row 1 = dst)
    edge_index = jax.random.randint(k_edge, (2, n_edges), 0, n_nodes)
    src, dst = edge_index[0], edge_index[1]
    # Dense adjacency A[dst, src] (counts parallel edges, like scatter-add)
    adj = jnp.zeros((n_nodes, n_nodes), jnp.float32).at[dst, src].add(1.0)

    # Graph membership: first half of nodes -> graph 0, second half -> graph 1
    batch = jnp.concatenate(
        [jnp.zeros(n_nodes // 2, jnp.int32), jnp.ones(n_nodes - n_nodes // 2, jnp.int32)]
    )
    pool_mat = (batch[None, :] == jnp.arange(n_graphs)[:, None]).astype(jnp.float32)

    params = init_params(k_param)

    out = embed_model_forward(x, adj, pool_mat, params)
    out = jax.block_until_ready(out)

    ref = embed_model_reference(x, adj, pool_mat, params)
    assert out.shape == (n_graphs, OUTPUT_DIM)
    # bf16 MXU path (weights/activations bf16, f32 accumulate) vs pure-f32 ref.
    assert jnp.allclose(out, ref, atol=3e-2, rtol=3e-2), (out, ref)

    print("KERNEL_OK")
</pallas_src>

<mosaic_0001>
module attributes {stable_mosaic.version = 11 : i64} {
  func.func @embed_kernel(%arg0: memref<16x8xf32, #tpu.memory_space<vmem>>, %arg1: memref<16x16xbf16, #tpu.memory_space<vmem>>, %arg2: memref<2x16xbf16, #tpu.memory_space<vmem>>, %arg3: memref<9x32x128xbf16, #tpu.memory_space<vmem>>, %arg4: memref<8x128xf32, #tpu.memory_space<vmem>>, %arg5: memref<2x128xf32, #tpu.memory_space<vmem>>) attributes {dimension_semantics = [], scalar_prefetch = 0 : i64, scratch_operands = 0 : i64, tpu.core_type = #tpu.core_type<tc>} {
    %c0 = arith.constant 0 : index
    %c0_0 = arith.constant 0 : index
    %0 = vector.load %arg1[%c0, %c0_0] : memref<16x16xbf16, #tpu.memory_space<vmem>>, vector<16x16xbf16>
    %c0_1 = arith.constant 0 : index
    %c0_2 = arith.constant 0 : index
    %1 = vector.load %arg2[%c0_1, %c0_2] : memref<2x16xbf16, #tpu.memory_space<vmem>>, vector<2x16xbf16>
    %c0_3 = arith.constant 0 : index
    %c0_4 = arith.constant 0 : index
    %2 = vector.load %arg4[%c0_3, %c0_4] : memref<8x128xf32, #tpu.memory_space<vmem>>, vector<8x128xf32>
    %c0_5 = arith.constant 0 : index
    %c0_6 = arith.constant 0 : index
    %3 = vector.load %arg0[%c0_5, %c0_6] : memref<16x8xf32, #tpu.memory_space<vmem>>, vector<16x8xf32>
    %4 = arith.truncf %3 : vector<16x8xf32> to vector<16x8xbf16>
    %c0_7 = arith.constant 0 : index
    %c0_8 = arith.constant 0 : index
    %c0_9 = arith.constant 0 : index
    %5 = vector.load %arg3[%c0_7, %c0_8, %c0_9] : memref<9x32x128xbf16, #tpu.memory_space<vmem>>, vector<1x32x128xbf16>
    %6 = vector.shape_cast %5 : vector<1x32x128xbf16> to vector<32x128xbf16>
    %7 = vector.extract_strided_slice %6 {offsets = [0, 0], sizes = [8, 128], strides = [1, 1]} : vector<32x128xbf16> to vector<8x128xbf16>
    %cst = arith.constant dense<0.000000e+00> : vector<16x128xf32>
    %8 = tpu.matmul %4, %7, %cst {dimension_numbers = #tpu.dot_dimension_numbers<[1], [0], [0], [1], [0, 0, 1, 1], [], []>} : vector<16x8xbf16>, vector<8x128xbf16>, vector<16x128xf32> -> vector<16x128xf32>
    %9 = vector.extract_strided_slice %2 {offsets = [0, 0], sizes = [1, 128], strides = [1, 1]} : vector<8x128xf32> to vector<1x128xf32>
    %10 = vector.broadcast %9 : vector<1x128xf32> to vector<16x128xf32>
    %11 = arith.addf %8, %10 : vector<16x128xf32>
    %12 = vector.extract_strided_slice %11 {offsets = [0, 0], sizes = [16, 32], strides = [1, 1]} : vector<16x128xf32> to vector<16x32xf32>
    %13 = arith.truncf %12 : vector<16x32xf32> to vector<16x32xbf16>
    %cst_10 = arith.constant dense<0.000000e+00> : vector<2x32xf32>
    %14 = tpu.matmul %1, %13, %cst_10 {dimension_numbers = #tpu.dot_dimension_numbers<[1], [0], [0], [1], [0, 0, 1, 1], [], []>} : vector<2x16xbf16>, vector<16x32xbf16>, vector<2x32xf32> -> vector<2x32xf32>
    %15 = arith.truncf %14 : vector<2x32xf32> to vector<2x32xbf16>
    %c5 = arith.constant 5 : index
    %c0_11 = arith.constant 0 : index
    %c0_12 = arith.constant 0 : index
    %16 = vector.load %arg3[%c5, %c0_11, %c0_12] : memref<9x32x128xbf16, #tpu.memory_space<vmem>>, vector<1x32x128xbf16>
    %17 = vector.shape_cast %16 : vector<1x32x128xbf16> to vector<32x128xbf16>
    %cst_13 = arith.constant dense<0.000000e+00> : vector<2x128xf32>
    %18 = tpu.matmul %15, %17, %cst_13 {dimension_numbers = #tpu.dot_dimension_numbers<[1], [0], [0], [1], [0, 0, 1, 1], [], []>} : vector<2x32xbf16>, vector<32x128xbf16>, vector<2x128xf32> -> vector<2x128xf32>
    %cst_14 = arith.constant dense<0.000000e+00> : vector<16x32xf32>
    %19 = tpu.matmul %0, %13, %cst_14 {dimension_numbers = #tpu.dot_dimension_numbers<[1], [0], [0], [1], [0, 0, 1, 1], [], []>} : vector<16x16xbf16>, vector<16x32xbf16>, vector<16x32xf32> -> vector<16x32xf32>
    %20 = arith.truncf %19 : vector<16x32xf32> to vector<16x32xbf16>
    %c1 = arith.constant 1 : index
    %c0_15 = arith.constant 0 : index
    %c0_16 = arith.constant 0 : index
    %21 = vector.load %arg3[%c1, %c0_15, %c0_16] : memref<9x32x128xbf16, #tpu.memory_space<vmem>>, vector<1x32x128xbf16>
    %22 = vector.shape_cast %21 : vector<1x32x128xbf16> to vector<32x128xbf16>
    %cst_17 = arith.constant dense<0.000000e+00> : vector<16x128xf32>
    %23 = tpu.matmul %20, %22, %cst_17 {dimension_numbers = #tpu.dot_dimension_numbers<[1], [0], [0], [1], [0, 0, 1, 1], [], []>} : vector<16x32xbf16>, vector<32x128xbf16>, vector<16x128xf32> -> vector<16x128xf32>
    %24 = vector.extract_strided_slice %2 {offsets = [1, 0], sizes = [1, 128], strides = [1, 1]} : vector<8x128xf32> to vector<1x128xf32>
    %25 = vector.broadcast %24 : vector<1x128xf32> to vector<16x128xf32>
    %26 = arith.addf %23, %25 : vector<16x128xf32>
    %cst_18 = arith.constant 0.000000e+00 : f32
    %27 = vector.broadcast %cst_18 : f32 to vector<16x128xf32>
    %28 = arith.maximumf %26, %27 : vector<16x128xf32>
    %29 = vector.extract_strided_slice %28 {offsets = [0, 0], sizes = [16, 32], strides = [1, 1]} : vector<16x128xf32> to vector<16x32xf32>
    %30 = arith.truncf %29 : vector<16x32xf32> to vector<16x32xbf16>
    %c2 = arith.constant 2 : index
    %c0_19 = arith.constant 0 : index
    %c0_20 = arith.constant 0 : index
    %31 = vector.load %arg3[%c2, %c0_19, %c0_20] : memref<9x32x128xbf16, #tpu.memory_space<vmem>>, vector<1x32x128xbf16>
    %32 = vector.shape_cast %31 : vector<1x32x128xbf16> to vector<32x128xbf16>
    %cst_21 = arith.constant dense<0.000000e+00> : vector<16x128xf32>
    %33 = tpu.matmul %30, %32, %cst_21 {dimension_numbers = #tpu.dot_dimension_numbers<[1], [0], [0], [1], [0, 0, 1, 1], [], []>} : vector<16x32xbf16>, vector<32x128xbf16>, vector<16x128xf32> -> vector<16x128xf32>
    %34 = vector.extract_strided_slice %2 {offsets = [2, 0], sizes = [1, 128], strides = [1, 1]} : vector<8x128xf32> to vector<1x128xf32>
    %35 = vector.broadcast %34 : vector<1x128xf32> to vector<16x128xf32>
    %36 = arith.addf %33, %35 : vector<16x128xf32>
    %cst_22 = arith.constant 0.000000e+00 : f32
    %37 = vector.broadcast %cst_22 : f32 to vector<16x128xf32>
    %38 = arith.maximumf %36, %37 : vector<16x128xf32>
    %39 = vector.extract_strided_slice %38 {offsets = [0, 0], sizes = [16, 32], strides = [1, 1]} : vector<16x128xf32> to vector<16x32xf32>
    %40 = arith.truncf %39 : vector<16x32xf32> to vector<16x32xbf16>
    %cst_23 = arith.constant dense<0.000000e+00> : vector<2x32xf32>
    %41 = tpu.matmul %1, %40, %cst_23 {dimension_numbers = #tpu.dot_dimension_numbers<[1], [0], [0], [1], [0, 0, 1, 1], [], []>} : vector<2x16xbf16>, vector<16x32xbf16>, vector<2x32xf32> -> vector<2x32xf32>
    %42 = arith.truncf %41 : vector<2x32xf32> to vector<2x32xbf16>
    %c6 = arith.constant 6 : index
    %c0_24 = arith.constant 0 : index
    %c0_25 = arith.constant 0 : index
    %43 = vector.load %arg3[%c6, %c0_24, %c0_25] : memref<9x32x128xbf16, #tpu.memory_space<vmem>>, vector<1x32x128xbf16>
    %44 = vector.shape_cast %43 : vector<1x32x128xbf16> to vector<32x128xbf16>
    %cst_26 = arith.constant dense<0.000000e+00> : vector<2x128xf32>
    %45 = tpu.matmul %42, %44, %cst_26 {dimension_numbers = #tpu.dot_dimension_numbers<[1], [0], [0], [1], [0, 0, 1, 1], [], []>} : vector<2x32xbf16>, vector<32x128xbf16>, vector<2x128xf32> -> vector<2x128xf32>
    %46 = arith.addf %18, %45 : vector<2x128xf32>
    %cst_27 = arith.constant dense<0.000000e+00> : vector<16x32xf32>
    %47 = tpu.matmul %0, %40, %cst_27 {dimension_numbers = #tpu.dot_dimension_numbers<[1], [0], [0], [1], [0, 0, 1, 1], [], []>} : vector<16x16xbf16>, vector<16x32xbf16>, vector<16x32xf32> -> vector<16x32xf32>
    %48 = arith.truncf %47 : vector<16x32xf32> to vector<16x32xbf16>
    %c3 = arith.constant 3 : index
    %c0_28 = arith.constant 0 : index
    %c0_29 = arith.constant 0 : index
    %49 = vector.load %arg3[%c3, %c0_28, %c0_29] : memref<9x32x128xbf16, #tpu.memory_space<vmem>>, vector<1x32x128xbf16>
    %50 = vector.shape_cast %49 : vector<1x32x128xbf16> to vector<32x128xbf16>
    %cst_30 = arith.constant dense<0.000000e+00> : vector<16x128xf32>
    %51 = tpu.matmul %48, %50, %cst_30 {dimension_numbers = #tpu.dot_dimension_numbers<[1], [0], [0], [1], [0, 0, 1, 1], [], []>} : vector<16x32xbf16>, vector<32x128xbf16>, vector<16x128xf32> -> vector<16x128xf32>
    %52 = vector.extract_strided_slice %2 {offsets = [3, 0], sizes = [1, 128], strides = [1, 1]} : vector<8x128xf32> to vector<1x128xf32>
    %53 = vector.broadcast %52 : vector<1x128xf32> to vector<16x128xf32>
    %54 = arith.addf %51, %53 : vector<16x128xf32>
    %cst_31 = arith.constant 0.000000e+00 : f32
    %55 = vector.broadcast %cst_31 : f32 to vector<16x128xf32>
    %56 = arith.maximumf %54, %55 : vector<16x128xf32>
    %57 = vector.extract_strided_slice %56 {offsets = [0, 0], sizes = [16, 32], strides = [1, 1]} : vector<16x128xf32> to vector<16x32xf32>
    %58 = arith.truncf %57 : vector<16x32xf32> to vector<16x32xbf16>
    %c4 = arith.constant 4 : index
    %c0_32 = arith.constant 0 : index
    %c0_33 = arith.constant 0 : index
    %59 = vector.load %arg3[%c4, %c0_32, %c0_33] : memref<9x32x128xbf16, #tpu.memory_space<vmem>>, vector<1x32x128xbf16>
    %60 = vector.shape_cast %59 : vector<1x32x128xbf16> to vector<32x128xbf16>
    %cst_34 = arith.constant dense<0.000000e+00> : vector<16x128xf32>
    %61 = tpu.matmul %58, %60, %cst_34 {dimension_numbers = #tpu.dot_dimension_numbers<[1], [0], [0], [1], [0, 0, 1, 1], [], []>} : vector<16x32xbf16>, vector<32x128xbf16>, vector<16x128xf32> -> vector<16x128xf32>
    %62 = vector.extract_strided_slice %2 {offsets = [4, 0], sizes = [1, 128], strides = [1, 1]} : vector<8x128xf32> to vector<1x128xf32>
    %63 = vector.broadcast %62 : vector<1x128xf32> to vector<16x128xf32>
    %64 = arith.addf %61, %63 : vector<16x128xf32>
    %65 = arith.addf %64, %11 : vector<16x128xf32>
    %cst_35 = arith.constant 0.000000e+00 : f32
    %66 = vector.broadcast %cst_35 : f32 to vector<16x128xf32>
    %67 = arith.maximumf %65, %66 : vector<16x128xf32>
    %68 = vector.extract_strided_slice %67 {offsets = [0, 0], sizes = [16, 32], strides = [1, 1]} : vector<16x128xf32> to vector<16x32xf32>
    %69 = arith.truncf %68 : vector<16x32xf32> to vector<16x32xbf16>
    %cst_36 = arith.constant dense<0.000000e+00> : vector<2x32xf32>
    %70 = tpu.matmul %1, %69, %cst_36 {dimension_numbers = #tpu.dot_dimension_numbers<[1], [0], [0], [1], [0, 0, 1, 1], [], []>} : vector<2x16xbf16>, vector<16x32xbf16>, vector<2x32xf32> -> vector<2x32xf32>
    %71 = arith.truncf %70 : vector<2x32xf32> to vector<2x32xbf16>
    %c7 = arith.constant 7 : index
    %c0_37 = arith.constant 0 : index
    %c0_38 = arith.constant 0 : index
    %72 = vector.load %arg3[%c7, %c0_37, %c0_38] : memref<9x32x128xbf16, #tpu.memory_space<vmem>>, vector<1x32x128xbf16>
    %73 = vector.shape_cast %72 : vector<1x32x128xbf16> to vector<32x128xbf16>
    %cst_39 = arith.constant dense<0.000000e+00> : vector<2x128xf32>
    %74 = tpu.matmul %71, %73, %cst_39 {dimension_numbers = #tpu.dot_dimension_numbers<[1], [0], [0], [1], [0, 0, 1, 1], [], []>} : vector<2x32xbf16>, vector<32x128xbf16>, vector<2x128xf32> -> vector<2x128xf32>
    %75 = arith.addf %46, %74 : vector<2x128xf32>
    %76 = vector.extract_strided_slice %2 {offsets = [5, 0], sizes = [1, 128], strides = [1, 1]} : vector<8x128xf32> to vector<1x128xf32>
    %77 = vector.broadcast %76 : vector<1x128xf32> to vector<2x128xf32>
    %78 = arith.addf %75, %77 : vector<2x128xf32>
    %cst_40 = arith.constant 0.000000e+00 : f32
    %79 = vector.broadcast %cst_40 : f32 to vector<2x128xf32>
    %80 = arith.maximumf %78, %79 : vector<2x128xf32>
    %81 = vector.extract_strided_slice %80 {offsets = [0, 0], sizes = [2, 32], strides = [1, 1]} : vector<2x128xf32> to vector<2x32xf32>
    %82 = arith.truncf %81 : vector<2x32xf32> to vector<2x32xbf16>
    %c8 = arith.constant 8 : index
    %c0_41 = arith.constant 0 : index
    %c0_42 = arith.constant 0 : index
    %83 = vector.load %arg3[%c8, %c0_41, %c0_42] : memref<9x32x128xbf16, #tpu.memory_space<vmem>>, vector<1x32x128xbf16>
    %84 = vector.shape_cast %83 : vector<1x32x128xbf16> to vector<32x128xbf16>
    %cst_43 = arith.constant dense<0.000000e+00> : vector<2x128xf32>
    %85 = tpu.matmul %82, %84, %cst_43 {dimension_numbers = #tpu.dot_dimension_numbers<[1], [0], [0], [1], [0, 0, 1, 1], [], []>} : vector<2x32xbf16>, vector<32x128xbf16>, vector<2x128xf32> -> vector<2x128xf32>
    %86 = vector.extract_strided_slice %2 {offsets = [6, 0], sizes = [1, 128], strides = [1, 1]} : vector<8x128xf32> to vector<1x128xf32>
    %87 = vector.broadcast %86 : vector<1x128xf32> to vector<2x128xf32>
    %88 = arith.addf %85, %87 : vector<2x128xf32>
    %c0_44 = arith.constant 0 : index
    %c0_45 = arith.constant 0 : index
    %89 = vector.load %arg5[%c0_44, %c0_45] : memref<2x128xf32, #tpu.memory_space<vmem>>, vector<2x128xf32>
    tpu.vector_store %arg5[%c0_44, %c0_45], %88 {strides = array<i32>} : memref<2x128xf32, #tpu.memory_space<vmem>>, vector<2x128xf32>,
    return
  }
}

</mosaic_0001>

<llo_original>
// kernel: tpu_custom_call.1
$region0: #{tpu_custom_call.1}
  #allocation0 [shape = 'u32[]', space=smem, size = 0x4, offset = 0x4, fixed_abs, tag = 'smem constant byte address 0x4 - core index']
  #allocation1 [shape = 'u32[144,128]{1,0:T(1,128)}', space=vmem, size = 0x12000, scoped, tag = 'internal scratch']
  %s0 = inlined_call_operand.vmem [shape: f32[16,8], index: 0, kind: input, shape index: {}]
  %s1 = inlined_call_operand.vmem [shape: bf16[16,16], index: 1, kind: input, shape index: {}]
  %s2 = inlined_call_operand.vmem [shape: bf16[2,16], index: 2, kind: input, shape index: {}]
  %s3 = inlined_call_operand.hbm [shape: bf16[9,32,128], index: 3, kind: input, shape index: {}]
  %s4 = inlined_call_operand.vmem [shape: f32[8,128], index: 4, kind: input, shape index: {}]
  %s5 = inlined_call_operand.hbm [shape: f32[2,128], index: 5, kind: output, shape index: {}]
  %s6 = sld [smem:[#allocation0]]
  $region34: #{tpu_custom_call.1} parent=0
    _
  %s8 = ssub.s32 1, %s6
  %s9 = scalar_select 0, %s8, %s6
  $region1: #{tpu_custom_call.1} parent=0
    #allocation2 [shape = 'u8[73728]{0}', space=vmem, size = 0x12000, scoped, tag = 'input window, operand 3, single buffered']
    #allocation3 [shape = 's32[1]{0}', space=sflag, size = 0x4, scoped, tag = 'scoped memory for tpu_custom_call.1']
    #allocation4 [shape = 's32[1]{0}', space=sflag, size = 0x4, scoped, tag = 'scoped memory for tpu_custom_call.1']
    #allocation5 [shape = 'u8[1024]{0}', space=vmem, size = 0x400, scoped, tag = 'output window, operand 0, single buffered']
    %10 = vsyncpa [#allocation3], 0
    %11 = vsyncpa [#allocation4], 0
    // Predicated region
    $region2: #{tpu_custom_call.1} parent=1 // pred_check
      _
    $region3: #{tpu_custom_call.1} parent=1 // pred_check_branch
      %13 = sbr.rel (0) target = $region5
    $region4: #{tpu_custom_call.1} parent=1 // pred_region
      _
    $region5: #{tpu_custom_call.1} parent=1 // pred_fallthru
      _
    // Predicated region
    $region6: #{tpu_custom_call.1} parent=1 // pred_check
      _
    $region7: #{tpu_custom_call.1} parent=1 // pred_check_branch
      %15 = sbr.rel (0) target = $region9
    $region8: #{tpu_custom_call.1} parent=1 // pred_region
      _
    $region9: #{tpu_custom_call.1} parent=1 // pred_fallthru
      _
    // Predicated region
    $region10: #{tpu_custom_call.1} parent=1 // pred_check
      _
    $region11: #{tpu_custom_call.1} parent=1 // pred_check_branch
      %17 = sbr.rel (0) target = $region13
    $region12: #{tpu_custom_call.1} parent=1 // pred_region
      _
    $region13: #{tpu_custom_call.1} parent=1 // pred_fallthru
      _
    // Predicated region
    $region14: #{tpu_custom_call.1} parent=1 // pred_check
      _
    $region15: #{tpu_custom_call.1} parent=1 // pred_check_branch
      %19 = sbr.rel (0) target = $region17
    $region16: #{tpu_custom_call.1} parent=1 // pred_region
      %s21 = ssub.s32 2304, 2304
      %22 = vsyncadd [#allocation3], %s21
      %s23 = sshll.u32 [#allocation2], 4
      %s24 = int_to_ptr.vmem [resolvable:$true] %s23
      %29 = dma.hbm_to_vmem [thread:$0]  %s3, 2304, %s24, [#allocation3], 64, 64, 4
    $region17: #{tpu_custom_call.1} parent=1 // pred_fallthru
      _
    // Predicated region
    $region18: #{tpu_custom_call.1} parent=1 // pred_check
      _
    $region19: #{tpu_custom_call.1} parent=1 // pred_check_branch
      %31 = sbr.rel (0) target = $region21
    $region20: #{tpu_custom_call.1} parent=1 // pred_region
      _
    $region21: #{tpu_custom_call.1} parent=1 // pred_fallthru
      _
    // Predicated region
    $region22: #{tpu_custom_call.1} parent=1 // pred_check
      _
    $region23: #{tpu_custom_call.1} parent=1 // pred_check_branch
      %33 = sbr.rel (0) target = $region25
    $region24: #{tpu_custom_call.1} parent=1 // pred_region
      %34 = dma.done [#allocation3], 2304
    $region25: #{tpu_custom_call.1} parent=1 // pred_fallthru
      _
    %v36 = vld [vmem:[%s1] sm:$0xf]
    %v37 = vld [vmem:[%s1 + $0x4] sm:$0xf]
    %v38 = vld [vmem:[%s2] sm:$0x1]
    %v39 = vld [vmem:[%s4] sm:$0xff]
    %v40 = vld [vmem:[%s0] sm:$0xff]
    %v41 = vld [vmem:[%s0 + $0x8] sm:$0xff]
    %v42 = vpack.c.bf16 %v41, %v40
    %v43 = vld [vmem:[#allocation2] sm:$0xf]
    %v44 = vlaneseq
    %v45 = vshrl.u32 %v44, 7
    %v46 = vsub.s32 0, %v45
    %v47 = vrot.slane %v39, %v46
    %vm48 = vcmask 64512
    %v50 = vsel %vm48, %v42, 0
    %vm52 = vcmask 1043456
    %v54 = vsel %vm52, %v43, 0
    %56 = vmatprep.subr.bf16.mxu0 0
    %57 = vmatpush1.bf16.msra.mxu0 0
    %58 = vmatprep.subr.bf16.mxu0 0
    %59 = vmatpush1.bf16.msra.mxu0 0
    %60 = vmatprep.subr.bf16.mxu0 0
    %61 = vmatpush1.bf16.msra.mxu0 0
    %62 = vmatprep.subr.bf16.mxu0 0
    %63 = vmatpush1.bf16.msra.mxu0 0
    %64 = vmatprep.subr.bf16.mxu0 0
    %65 = vmatpush1.bf16.msra.mxu0 0
    %66 = vmatprep.subr.bf16.mxu0 0
    %67 = vmatpush1.bf16.msra.mxu0 0
    %68 = vmatprep.subr.bf16.mxu0 0
    %69 = vmatpush1.bf16.msra.mxu0 0
    %70 = vmatprep.subr.bf16.mxu0 0
    %71 = vmatpush1.bf16.msra.mxu0 %v54
    %72 = vmatprep.subr.bf16.mxu0 0
    %73 = vmatpush2.bf16.msra.mxu0 0
    %74 = vmatprep.subr.bf16.mxu0 0
    %75 = vmatpush2.bf16.msra.mxu0 0
    %76 = vmatprep.subr.bf16.mxu0 0
    %77 = vmatpush2.bf16.msra.mxu0 0
    %78 = vmatprep.subr.bf16.mxu0 0
    %79 = vmatpush2.bf16.msra.mxu0 0
    %80 = vmatprep.subr.bf16.mxu0 0
    %81 = vmatpush2.bf16.msra.mxu0 0
    %82 = vmatprep.subr.bf16.mxu0 0
    %83 = vmatpush2.bf16.msra.mxu0 0
    %84 = vmatprep.subr.bf16.mxu0 0
    %85 = vmatpush2.bf16.msra.mxu0 0
    %86 = vmatprep.subr.bf16.mxu0 0
    %87 = vmatpush2.bf16.msra.mxu0 0
    %88 = vmatprep.mubr.bf16.mxu0 0
    %89 = vmatmul.mubr.bf16.gmra.mxu0 %v50
    %v90 = vpop.f32.mrf.mxu0
    %v91 = vadd.f32 %v47, %v90
    %v92 = vpop.f32.mrf.mxu0
    %v93 = vpop.f32.mrf.mxu0
    %v94 = vadd.f32 %v47, %v93
    %v95 = vpop.f32.mrf.mxu0
    %96 = vdwg.mxu0
    %v97 = vpack.c.bf16 %v94, %v91
    %vm98 = vcmask 130048
    %v100 = vsel %vm98, %v38, 0
    %102 = vmatprep.subr.bf16.mxu0 0
    %103 = vmatpush1.bf16.msra.mxu0 0
    %104 = vmatprep.subr.bf16.mxu0 0
    %105 = vmatpush1.bf16.msra.mxu0 0
    %106 = vmatprep.subr.bf16.mxu0 0
    %107 = vmatpush1.bf16.msra.mxu0 0
    %108 = vmatprep.subr.bf16.mxu0 0
    %109 = vmatpush1.bf16.msra.mxu0 0
    %110 = vmatprep.subr.bf16.mxu0 0
    %111 = vmatpush1.bf16.msra.mxu0 0
    %112 = vmatprep.subr.bf16.mxu0 0
    %113 = vmatpush1.bf16.msra.mxu0 0
    %114 = vmatprep.subr.bf16.mxu0 0
    %115 = vmatpush1.bf16.msra.mxu0 0
    %116 = vmatprep.subr.bf16.mxu0 0
    %117 = vmatpush1.bf16.msra.mxu0 %v97
    %118 = vmatprep.subr.bf16.mxu0 0
    %119 = vmatpush2.bf16.msra.mxu0 0
    %120 = vmatprep.subr.bf16.mxu0 0
    %121 = vmatpush2.bf16.msra.mxu0 0
    %122 = vmatprep.subr.bf16.mxu0 0
    %123 = vmatpush2.bf16.msra.mxu0 0
    %124 = vmatprep.subr.bf16.mxu0 0
    %125 = vmatpush2.bf16.msra.mxu0 0
    %126 = vmatprep.subr.bf16.mxu0 0
    %127 = vmatpush2.bf16.msra.mxu0 0
    %128 = vmatprep.subr.bf16.mxu0 0
    %129 = vmatpush2.bf16.msra.mxu0 0
    %130 = vmatprep.subr.bf16.mxu0 0
    %131 = vmatpush2.bf16.msra.mxu0 0
    %132 = vmatprep.subr.bf16.mxu0 0
    %133 = vmatpush2.bf16.msra.mxu0 0
    %134 = vmatprep.mubr.bf16.mxu0 0
    %135 = vmatmul.mubr.bf16.gmra.mxu0 %v100
    %v136 = vpop.f32.mrf.mxu0
    %v137 = vadd.f32 0.0, %v136
    %v138 = vpop.f32.mrf.mxu0
    %v139 = vpop.f32.mrf.mxu0
    %v140 = vpop.f32.mrf.mxu0
    %141 = vdwg.mxu0
    %v142 = vpack.c.bf16 %v137, %v137
    %s143 = scalar_lea.vmem [#allocation2], 80
    %v144 = vld [vmem:[%s143] sm:$0xf]
    %v145 = vld [vmem:[%s143 + $0x4] sm:$0xf]
    %v146 = vld [vmem:[%s143 + $0x8] sm:$0xf]
    %v147 = vld [vmem:[%s143 + $0xc] sm:$0xf]
    %v150 = vunpack.c.l.b16 %v36
    %v151 = vunpack.c.l.b16 %v37
    %v152 = vpack.c.b16 %v151, %v150
    %v154 = vsel %vm98, %v152, 0
    %156 = vmatprep.subr.bf16.mxu0 0
    %157 = vmatpush1.bf16.msra.mxu0 0
    %158 = vmatprep.subr.bf16.mxu0 0
    %159 = vmatpush1.bf16.msra.mxu0 0
    %160 = vmatprep.subr.bf16.mxu0 0
    %161 = vmatpush1.bf16.msra.mxu0 0
    %162 = vmatprep.subr.bf16.mxu0 0
    %163 = vmatpush1.bf16.msra.mxu0 0
    %164 = vmatprep.subr.bf16.mxu0 0
    %165 = vmatpush1.bf16.msra.mxu0 0
    %166 = vmatprep.subr.bf16.mxu0 0
    %167 = vmatpush1.bf16.msra.mxu0 0
    %168 = vmatprep.subr.bf16.mxu0 0
    %169 = vmatpush1.bf16.msra.mxu0 0
    %170 = vmatprep.subr.bf16.mxu0 0
    %171 = vmatpush1.bf16.msra.mxu0 %v97
    %172 = vmatprep.subr.bf16.mxu0 0
    %173 = vmatpush2.bf16.msra.mxu0 0
    %174 = vmatprep.subr.bf16.mxu0 0
    %175 = vmatpush2.bf16.msra.mxu0 0
    %176 = vmatprep.subr.bf16.mxu0 0
    %177 = vmatpush2.bf16.msra.mxu0 0
    %178 = vmatprep.subr.bf16.mxu0 0
    %179 = vmatpush2.bf16.msra.mxu0 0
    %180 = vmatprep.subr.bf16.mxu0 0
    %181 = vmatpush2.bf16.msra.mxu0 0
    %182 = vmatprep.subr.bf16.mxu0 0
    %183 = vmatpush2.bf16.msra.mxu0 0
    %184 = vmatprep.subr.bf16.mxu0 0
    %185 = vmatpush2.bf16.msra.mxu0 0
    %186 = vmatprep.subr.bf16.mxu0 0
    %187 = vmatpush2.bf16.msra.mxu0 0
    %188 = vmatprep.mubr.bf16.mxu0 0
    %189 = vmatmul.mubr.bf16.gmra.mxu0 %v154
    %v190 = vpop.f32.mrf.mxu0
    %v191 = vadd.f32 0.0, %v190
    %v192 = vpop.f32.mrf.mxu0
    %v193 = vpop.f32.mrf.mxu0
    %v194 = vadd.f32 0.0, %v193
    %v195 = vpop.f32.mrf.mxu0
    %196 = vdwg.mxu0
    %v197 = vpack.c.bf16 %v194, %v191
    %s198 = scalar_lea.vmem [#allocation2], 16
    %v199 = vld [vmem:[%s198] sm:$0xf]
    %v200 = vld [vmem:[%s198 + $0x4] sm:$0xf]
    %v201 = vld [vmem:[%s198 + $0x8] sm:$0xf]
    %v202 = vld [vmem:[%s198 + $0xc] sm:$0xf]
    %v203 = vlaneseq
    %v204 = vshrl.u32 %v203, 7
    %v205 = vsub.s32 1, %v204
    %v206 = vrot.slane %v39, %v205
    %v211 = vunpack.c.l.b16 %v199
    %v212 = vunpack.c.l.b16 %v200
    %v213 = vunpack.c.l.b16 %v201
    %v214 = vunpack.c.l.b16 %v202
    %v215 = vpack.c.b16 %v212, %v211
    %v216 = vpack.c.b16 %v214, %v213
    %vm219 = vcmask 261120
    %v221 = vsel %vm219, %v197, 0
    %223 = vmatprep.subr.bf16.mxu0 0
    %224 = vmatpush1.bf16.msra.mxu0 0
    %225 = vmatprep.subr.bf16.mxu0 0
    %226 = vmatpush1.bf16.msra.mxu0 0
    %227 = vmatprep.subr.bf16.mxu0 0
    %228 = vmatpush1.bf16.msra.mxu0 0
    %229 = vmatprep.subr.bf16.mxu0 0
    %230 = vmatpush1.bf16.msra.mxu0 0
    %231 = vmatprep.subr.bf16.mxu0 0
    %232 = vmatpush1.bf16.msra.mxu0 0
    %233 = vmatprep.subr.bf16.mxu0 0
    %234 = vmatpush1.bf16.msra.mxu0 0
    %235 = vmatprep.subr.bf16.mxu0 0
    %236 = vmatpush1.bf16.msra.mxu0 %v216
    %237 = vmatprep.subr.bf16.mxu0 0
    %238 = vmatpush1.bf16.msra.mxu0 %v215
    %239 = vmatprep.subr.bf16.mxu0 0
    %240 = vmatpush2.bf16.msra.mxu0 0
    %241 = vmatprep.subr.bf16.mxu0 0
    %242 = vmatpush2.bf16.msra.mxu0 0
    %243 = vmatprep.subr.bf16.mxu0 0
    %244 = vmatpush2.bf16.msra.mxu0 0
    %245 = vmatprep.subr.bf16.mxu0 0
    %246 = vmatpush2.bf16.msra.mxu0 0
    %247 = vmatprep.subr.bf16.mxu0 0
    %248 = vmatpush2.bf16.msra.mxu0 0
    %249 = vmatprep.subr.bf16.mxu0 0
    %250 = vmatpush2.bf16.msra.mxu0 0
    %251 = vmatprep.subr.bf16.mxu0 0
    %252 = vmatpush2.bf16.msra.mxu0 0
    %253 = vmatprep.subr.bf16.mxu0 0
    %254 = vmatpush2.bf16.msra.mxu0 0
    %255 = vmatprep.mubr.bf16.mxu0 0
    %256 = vmatmul.mubr.bf16.gmra.mxu0 %v221
    %v257 = vpop.f32.mrf.mxu0
    %v258 = vadd.f32 %v206, %v257
    %v259 = vpop.f32.mrf.mxu0
    %v260 = vpop.f32.mrf.mxu0
    %v261 = vadd.f32 %v206, %v260
    %v262 = vpop.f32.mrf.mxu0
    %263 = vdwg.mxu0
    %v264 = vmax.f32 %v258, 0.0
    %v265 = vmax.f32 %v261, 0.0
    %v266 = vpack.c.bf16 %v265, %v264
    %s267 = scalar_lea.vmem [#allocation2], 32
    %v268 = vld [vmem:[%s267] sm:$0xf]
    %v269 = vld [vmem:[%s267 + $0x4] sm:$0xf]
    %v270 = vld [vmem:[%s267 + $0x8] sm:$0xf]
    %v271 = vld [vmem:[%s267 + $0xc] sm:$0xf]
    %v272 = vlaneseq
    %v273 = vshrl.u32 %v272, 7
    %v274 = vsub.s32 2, %v273
    %v275 = vrot.slane %v39, %v274
    %v280 = vunpack.c.l.b16 %v268
    %v281 = vunpack.c.l.b16 %v269
    %v282 = vunpack.c.l.b16 %v270
    %v283 = vunpack.c.l.b16 %v271
    %v284 = vpack.c.b16 %v281, %v280
    %v285 = vpack.c.b16 %v283, %v282
    %v289 = vsel %vm219, %v266, 0
    %291 = vmatprep.subr.bf16.mxu0 0
    %292 = vmatpush1.bf16.msra.mxu0 0
    %293 = vmatprep.subr.bf16.mxu0 0
    %294 = vmatpush1.bf16.msra.mxu0 0
    %295 = vmatprep.subr.bf16.mxu0 0
    %296 = vmatpush1.bf16.msra.mxu0 0
    %297 = vmatprep.subr.bf16.mxu0 0
    %298 = vmatpush1.bf16.msra.mxu0 0
    %299 = vmatprep.subr.bf16.mxu0 0
    %300 = vmatpush1.bf16.msra.mxu0 0
    %301 = vmatprep.subr.bf16.mxu0 0
    %302 = vmatpush1.bf16.msra.mxu0 0
    %303 = vmatprep.subr.bf16.mxu0 0
    %304 = vmatpush1.bf16.msra.mxu0 %v285
    %305 = vmatprep.subr.bf16.mxu0 0
    %306 = vmatpush1.bf16.msra.mxu0 %v284
    %307 = vmatprep.subr.bf16.mxu0 0
    %308 = vmatpush2.bf16.msra.mxu0 0
    %309 = vmatprep.subr.bf16.mxu0 0
    %310 = vmatpush2.bf16.msra.mxu0 0
    %311 = vmatprep.subr.bf16.mxu0 0
    %312 = vmatpush2.bf16.msra.mxu0 0
    %313 = vmatprep.subr.bf16.mxu0 0
    %314 = vmatpush2.bf16.msra.mxu0 0
    %315 = vmatprep.subr.bf16.mxu0 0
    %316 = vmatpush2.bf16.msra.mxu0 0
    %317 = vmatprep.subr.bf16.mxu0 0
    %318 = vmatpush2.bf16.msra.mxu0 0
    %319 = vmatprep.subr.bf16.mxu0 0
    %320 = vmatpush2.bf16.msra.mxu0 0
    %321 = vmatprep.subr.bf16.mxu0 0
    %322 = vmatpush2.bf16.msra.mxu0 0
    %323 = vmatprep.mubr.bf16.mxu0 0
    %324 = vmatmul.mubr.bf16.gmra.mxu0 %v289
    %v325 = vpop.f32.mrf.mxu0
    %v326 = vadd.f32 %v275, %v325
    %v327 = vpop.f32.mrf.mxu0
    %v328 = vpop.f32.mrf.mxu0
    %v329 = vadd.f32 %v275, %v328
    %v330 = vpop.f32.mrf.mxu0
    %331 = vdwg.mxu0
    %v332 = vmax.f32 %v326, 0.0
    %v333 = vmax.f32 %v329, 0.0
    %v334 = vpack.c.bf16 %v333, %v332
    %335 = vmatprep.subr.bf16.mxu0 0
    %336 = vmatpush1.bf16.msra.mxu0 0
    %337 = vmatprep.subr.bf16.mxu0 0
    %338 = vmatpush1.bf16.msra.mxu0 0
    %339 = vmatprep.subr.bf16.mxu0 0
    %340 = vmatpush1.bf16.msra.mxu0 0
    %341 = vmatprep.subr.bf16.mxu0 0
    %342 = vmatpush1.bf16.msra.mxu0 0
    %343 = vmatprep.subr.bf16.mxu0 0
    %344 = vmatpush1.bf16.msra.mxu0 0
    %345 = vmatprep.subr.bf16.mxu0 0
    %346 = vmatpush1.bf16.msra.mxu0 0
    %347 = vmatprep.subr.bf16.mxu0 0
    %348 = vmatpush1.bf16.msra.mxu0 0
    %349 = vmatprep.subr.bf16.mxu0 0
    %350 = vmatpush1.bf16.msra.mxu0 %v334
    %351 = vmatprep.subr.bf16.mxu0 0
    %352 = vmatpush2.bf16.msra.mxu0 0
    %353 = vmatprep.subr.bf16.mxu0 0
    %354 = vmatpush2.bf16.msra.mxu0 0
    %355 = vmatprep.subr.bf16.mxu0 0
    %356 = vmatpush2.bf16.msra.mxu0 0
    %357 = vmatprep.subr.bf16.mxu0 0
    %358 = vmatpush2.bf16.msra.mxu0 0
    %359 = vmatprep.subr.bf16.mxu0 0
    %360 = vmatpush2.bf16.msra.mxu0 0
    %361 = vmatprep.subr.bf16.mxu0 0
    %362 = vmatpush2.bf16.msra.mxu0 0
    %363 = vmatprep.subr.bf16.mxu0 0
    %364 = vmatpush2.bf16.msra.mxu0 0
    %365 = vmatprep.subr.bf16.mxu0 0
    %366 = vmatpush2.bf16.msra.mxu0 0
    %367 = vmatprep.mubr.bf16.mxu0 0
    %368 = vmatmul.mubr.bf16.gmra.mxu0 %v100
    %v369 = vpop.f32.mrf.mxu0
    %v370 = vadd.f32 0.0, %v369
    %v371 = vpop.f32.mrf.mxu0
    %v372 = vpop.f32.mrf.mxu0
    %v373 = vpop.f32.mrf.mxu0
    %374 = vdwg.mxu0
    %v375 = vpack.c.bf16 %v370, %v370
    %s376 = scalar_lea.vmem [#allocation2], 96
    %v377 = vld [vmem:[%s376] sm:$0xf]
    %v378 = vld [vmem:[%s376 + $0x4] sm:$0xf]
    %v379 = vld [vmem:[%s376 + $0x8] sm:$0xf]
    %v380 = vld [vmem:[%s376 + $0xc] sm:$0xf]
    %v385 = vunpack.c.l.b16 %v377
    %v386 = vunpack.c.l.b16 %v378
    %v387 = vunpack.c.l.b16 %v379
    %v388 = vunpack.c.l.b16 %v380
    %v389 = vpack.c.b16 %v386, %v385
    %v390 = vpack.c.b16 %v388, %v387
    %v394 = vsel %vm219, %v375, 0
    %396 = vmatprep.subr.bf16.mxu0 0
    %397 = vmatpush1.bf16.msra.mxu0 0
    %398 = vmatprep.subr.bf16.mxu0 0
    %399 = vmatpush1.bf16.msra.mxu0 0
    %400 = vmatprep.subr.bf16.mxu0 0
    %401 = vmatpush1.bf16.msra.mxu0 0
    %402 = vmatprep.subr.bf16.mxu0 0
    %403 = vmatpush1.bf16.msra.mxu0 0
    %404 = vmatprep.subr.bf16.mxu0 0
    %405 = vmatpush1.bf16.msra.mxu0 0
    %406 = vmatprep.subr.bf16.mxu0 0
    %407 = vmatpush1.bf16.msra.mxu0 0
    %408 = vmatprep.subr.bf16.mxu0 0
    %409 = vmatpush1.bf16.msra.mxu0 %v390
    %410 = vmatprep.subr.bf16.mxu0 0
    %411 = vmatpush1.bf16.msra.mxu0 %v389
    %412 = vmatprep.subr.bf16.mxu0 0
    %413 = vmatpush2.bf16.msra.mxu0 0
    %414 = vmatprep.subr.bf16.mxu0 0
    %415 = vmatpush2.bf16.msra.mxu0 0
    %416 = vmatprep.subr.bf16.mxu0 0
    %417 = vmatpush2.bf16.msra.mxu0 0
    %418 = vmatprep.subr.bf16.mxu0 0
    %419 = vmatpush2.bf16.msra.mxu0 0
    %420 = vmatprep.subr.bf16.mxu0 0
    %421 = vmatpush2.bf16.msra.mxu0 0
    %422 = vmatprep.subr.bf16.mxu0 0
    %423 = vmatpush2.bf16.msra.mxu0 0
    %424 = vmatprep.subr.bf16.mxu0 0
    %425 = vmatpush2.bf16.msra.mxu0 0
    %426 = vmatprep.subr.bf16.mxu0 0
    %427 = vmatpush2.bf16.msra.mxu0 0
    %428 = vmatprep.mubr.bf16.mxu0 0
    %429 = vmatmul.mubr.bf16.gmra.mxu0 %v394
    %v430 = vpop.f32.mrf.mxu0
    %v431 = vadd.f32 0.0, %v430
    %v432 = vpop.f32.mrf.mxu0
    %v433 = vpop.f32.mrf.mxu0
    %v434 = vpop.f32.mrf.mxu0
    %435 = vdwg.mxu0
    %v440 = vunpack.c.l.b16 %v144
    %v441 = vunpack.c.l.b16 %v145
    %v442 = vunpack.c.l.b16 %v146
    %v443 = vunpack.c.l.b16 %v147
    %v444 = vpack.c.b16 %v441, %v440
    %v445 = vpack.c.b16 %v443, %v442
    %v449 = vsel %vm219, %v142, 0
    %451 = vmatprep.subr.bf16.mxu0 0
    %452 = vmatpush1.bf16.msra.mxu0 0
    %453 = vmatprep.subr.bf16.mxu0 0
    %454 = vmatpush1.bf16.msra.mxu0 0
    %455 = vmatprep.subr.bf16.mxu0 0
    %456 = vmatpush1.bf16.msra.mxu0 0
    %457 = vmatprep.subr.bf16.mxu0 0
    %458 = vmatpush1.bf16.msra.mxu0 0
    %459 = vmatprep.subr.bf16.mxu0 0
    %460 = vmatpush1.bf16.msra.mxu0 0
    %461 = vmatprep.subr.bf16.mxu0 0
    %462 = vmatpush1.bf16.msra.mxu0 0
    %463 = vmatprep.subr.bf16.mxu0 0
    %464 = vmatpush1.bf16.msra.mxu0 %v445
    %465 = vmatprep.subr.bf16.mxu0 0
    %466 = vmatpush1.bf16.msra.mxu0 %v444
    %467 = vmatprep.subr.bf16.mxu0 0
    %468 = vmatpush2.bf16.msra.mxu0 0
    %469 = vmatprep.subr.bf16.mxu0 0
    %470 = vmatpush2.bf16.msra.mxu0 0
    %471 = vmatprep.subr.bf16.mxu0 0
    %472 = vmatpush2.bf16.msra.mxu0 0
    %473 = vmatprep.subr.bf16.mxu0 0
    %474 = vmatpush2.bf16.msra.mxu0 0
    %475 = vmatprep.subr.bf16.mxu0 0
    %476 = vmatpush2.bf16.msra.mxu0 0
    %477 = vmatprep.subr.bf16.mxu0 0
    %478 = vmatpush2.bf16.msra.mxu0 0
    %479 = vmatprep.subr.bf16.mxu0 0
    %480 = vmatpush2.bf16.msra.mxu0 0
    %481 = vmatprep.subr.bf16.mxu0 0
    %482 = vmatpush2.bf16.msra.mxu0 0
    %483 = vmatprep.mubr.bf16.mxu0 0
    %484 = vmatmul.mubr.bf16.gmra.mxu0 %v449
    %v485 = vpop.f32.mrf.mxu0
    %v486 = vadd.f32 %v431, %v485
    %v487 = vpop.f32.mrf.mxu0
    %v488 = vpop.f32.mrf.mxu0
    %v489 = vpop.f32.mrf.mxu0
    %490 = vdwg.mxu0
    %491 = vmatprep.subr.bf16.mxu0 0
    %492 = vmatpush1.bf16.msra.mxu0 0
    %493 = vmatprep.subr.bf16.mxu0 0
    %494 = vmatpush1.bf16.msra.mxu0 0
    %495 = vmatprep.subr.bf16.mxu0 0
    %496 = vmatpush1.bf16.msra.mxu0 0
    %497 = vmatprep.subr.bf16.mxu0 0
    %498 = vmatpush1.bf16.msra.mxu0 0
    %499 = vmatprep.subr.bf16.mxu0 0
    %500 = vmatpush1.bf16.msra.mxu0 0
    %501 = vmatprep.subr.bf16.mxu0 0
    %502 = vmatpush1.bf16.msra.mxu0 0
    %503 = vmatprep.subr.bf16.mxu0 0
    %504 = vmatpush1.bf16.msra.mxu0 0
    %505 = vmatprep.subr.bf16.mxu0 0
    %506 = vmatpush1.bf16.msra.mxu0 %v334
    %507 = vmatprep.subr.bf16.mxu0 0
    %508 = vmatpush2.bf16.msra.mxu0 0
    %509 = vmatprep.subr.bf16.mxu0 0
    %510 = vmatpush2.bf16.msra.mxu0 0
    %511 = vmatprep.subr.bf16.mxu0 0
    %512 = vmatpush2.bf16.msra.mxu0 0
    %513 = vmatprep.subr.bf16.mxu0 0
    %514 = vmatpush2.bf16.msra.mxu0 0
    %515 = vmatprep.subr.bf16.mxu0 0
    %516 = vmatpush2.bf16.msra.mxu0 0
    %517 = vmatprep.subr.bf16.mxu0 0
    %518 = vmatpush2.bf16.msra.mxu0 0
    %519 = vmatprep.subr.bf16.mxu0 0
    %520 = vmatpush2.bf16.msra.mxu0 0
    %521 = vmatprep.subr.bf16.mxu0 0
    %522 = vmatpush2.bf16.msra.mxu0 0
    %523 = vmatprep.mubr.bf16.mxu0 0
    %524 = vmatmul.mubr.bf16.gmra.mxu0 %v154
    %v525 = vpop.f32.mrf.mxu0
    %v526 = vadd.f32 0.0, %v525
    %v527 = vpop.f32.mrf.mxu0
    %v528 = vpop.f32.mrf.mxu0
    %v529 = vadd.f32 0.0, %v528
    %v530 = vpop.f32.mrf.mxu0
    %531 = vdwg.mxu0
    %v532 = vpack.c.bf16 %v529, %v526
    %s533 = scalar_lea.vmem [#allocation2], 48
    %v534 = vld [vmem:[%s533] sm:$0xf]
    %v535 = vld [vmem:[%s533 + $0x4] sm:$0xf]
    %v536 = vld [vmem:[%s533 + $0x8] sm:$0xf]
    %v537 = vld [vmem:[%s533 + $0xc] sm:$0xf]
    %v538 = vlaneseq
    %v539 = vshrl.u32 %v538, 7
    %v540 = vsub.s32 3, %v539
    %v541 = vrot.slane %v39, %v540
    %v546 = vunpack.c.l.b16 %v534
    %v547 = vunpack.c.l.b16 %v535
    %v548 = vunpack.c.l.b16 %v536
    %v549 = vunpack.c.l.b16 %v537
    %v550 = vpack.c.b16 %v547, %v546
    %v551 = vpack.c.b16 %v549, %v548
    %v555 = vsel %vm219, %v532, 0
    %557 = vmatprep.subr.bf16.mxu0 0
    %558 = vmatpush1.bf16.msra.mxu0 0
    %559 = vmatprep.subr.bf16.mxu0 0
    %560 = vmatpush1.bf16.msra.mxu0 0
    %561 = vmatprep.subr.bf16.mxu0 0
    %562 = vmatpush1.bf16.msra.mxu0 0
    %563 = vmatprep.subr.bf16.mxu0 0
    %564 = vmatpush1.bf16.msra.mxu0 0
    %565 = vmatprep.subr.bf16.mxu0 0
    %566 = vmatpush1.bf16.msra.mxu0 0
    %567 = vmatprep.subr.bf16.mxu0 0
    %568 = vmatpush1.bf16.msra.mxu0 0
    %569 = vmatprep.subr.bf16.mxu0 0
    %570 = vmatpush1.bf16.msra.mxu0 %v551
    %571 = vmatprep.subr.bf16.mxu0 0
    %572 = vmatpush1.bf16.msra.mxu0 %v550
    %573 = vmatprep.subr.bf16.mxu0 0
    %574 = vmatpush2.bf16.msra.mxu0 0
    %575 = vmatprep.subr.bf16.mxu0 0
    %576 = vmatpush2.bf16.msra.mxu0 0
    %577 = vmatprep.subr.bf16.mxu0 0
    %578 = vmatpush2.bf16.msra.mxu0 0
    %579 = vmatprep.subr.bf16.mxu0 0
    %580 = vmatpush2.bf16.msra.mxu0 0
    %581 = vmatprep.subr.bf16.mxu0 0
    %582 = vmatpush2.bf16.msra.mxu0 0
    %583 = vmatprep.subr.bf16.mxu0 0
    %584 = vmatpush2.bf16.msra.mxu0 0
    %585 = vmatprep.subr.bf16.mxu0 0
    %586 = vmatpush2.bf16.msra.mxu0 0
    %587 = vmatprep.subr.bf16.mxu0 0
    %588 = vmatpush2.bf16.msra.mxu0 0
    %589 = vmatprep.mubr.bf16.mxu0 0
    %590 = vmatmul.mubr.bf16.gmra.mxu0 %v555
    %v591 = vpop.f32.mrf.mxu0
    %v592 = vadd.f32 %v541, %v591
    %v593 = vpop.f32.mrf.mxu0
    %v594 = vpop.f32.mrf.mxu0
    %v595 = vadd.f32 %v541, %v594
    %v596 = vpop.f32.mrf.mxu0
    %597 = vdwg.mxu0
    %v598 = vmax.f32 %v592, 0.0
    %v599 = vmax.f32 %v595, 0.0
    %v600 = vpack.c.bf16 %v599, %v598
    %s601 = scalar_lea.vmem [#allocation2], 64
    %v602 = vld [vmem:[%s601] sm:$0xf]
    %v603 = vld [vmem:[%s601 + $0x4] sm:$0xf]
    %v604 = vld [vmem:[%s601 + $0x8] sm:$0xf]
    %v605 = vld [vmem:[%s601 + $0xc] sm:$0xf]
    %v606 = vlaneseq
    %v607 = vshrl.u32 %v606, 7
    %v608 = vsub.s32 4, %v607
    %v609 = vrot.slane %v39, %v608
    %v614 = vunpack.c.l.b16 %v602
    %v615 = vunpack.c.l.b16 %v603
    %v616 = vunpack.c.l.b16 %v604
    %v617 = vunpack.c.l.b16 %v605
    %v618 = vpack.c.b16 %v615, %v614
    %v619 = vpack.c.b16 %v617, %v616
    %v623 = vsel %vm219, %v600, 0
    %625 = vmatprep.subr.bf16.mxu0 0
    %626 = vmatpush1.bf16.msra.mxu0 0
    %627 = vmatprep.subr.bf16.mxu0 0
    %628 = vmatpush1.bf16.msra.mxu0 0
    %629 = vmatprep.subr.bf16.mxu0 0
    %630 = vmatpush1.bf16.msra.mxu0 0
    %631 = vmatprep.subr.bf16.mxu0 0
    %632 = vmatpush1.bf16.msra.mxu0 0
    %633 = vmatprep.subr.bf16.mxu0 0
    %634 = vmatpush1.bf16.msra.mxu0 0
    %635 = vmatprep.subr.bf16.mxu0 0
    %636 = vmatpush1.bf16.msra.mxu0 0
    %637 = vmatprep.subr.bf16.mxu0 0
    %638 = vmatpush1.bf16.msra.mxu0 %v619
    %639 = vmatprep.subr.bf16.mxu0 0
    %640 = vmatpush1.bf16.msra.mxu0 %v618
    %641 = vmatprep.subr.bf16.mxu0 0
    %642 = vmatpush2.bf16.msra.mxu0 0
    %643 = vmatprep.subr.bf16.mxu0 0
    %644 = vmatpush2.bf16.msra.mxu0 0
    %645 = vmatprep.subr.bf16.mxu0 0
    %646 = vmatpush2.bf16.msra.mxu0 0
    %647 = vmatprep.subr.bf16.mxu0 0
    %648 = vmatpush2.bf16.msra.mxu0 0
    %649 = vmatprep.subr.bf16.mxu0 0
    %650 = vmatpush2.bf16.msra.mxu0 0
    %651 = vmatprep.subr.bf16.mxu0 0
    %652 = vmatpush2.bf16.msra.mxu0 0
    %653 = vmatprep.subr.bf16.mxu0 0
    %654 = vmatpush2.bf16.msra.mxu0 0
    %655 = vmatprep.subr.bf16.mxu0 0
    %656 = vmatpush2.bf16.msra.mxu0 0
    %657 = vmatprep.mubr.bf16.mxu0 0
    %658 = vmatmul.mubr.bf16.gmra.mxu0 %v623
    %v659 = vpop.f32.mrf.mxu0
    %v660 = vadd.f32 %v609, %v659
    %v661 = vpop.f32.mrf.mxu0
    %v662 = vpop.f32.mrf.mxu0
    %v663 = vadd.f32 %v609, %v662
    %v664 = vpop.f32.mrf.mxu0
    %665 = vdwg.mxu0
    %v666 = vadd.f32 %v660, %v91
    %v667 = vadd.f32 %v663, %v94
    %v668 = vmax.f32 %v666, 0.0
    %v669 = vmax.f32 %v667, 0.0
    %v670 = vpack.c.bf16 %v669, %v668
    %671 = vmatprep.subr.bf16.mxu0 0
    %672 = vmatpush1.bf16.msra.mxu0 0
    %673 = vmatprep.subr.bf16.mxu0 0
    %674 = vmatpush1.bf16.msra.mxu0 0
    %675 = vmatprep.subr.bf16.mxu0 0
    %676 = vmatpush1.bf16.msra.mxu0 0
    %677 = vmatprep.subr.bf16.mxu0 0
    %678 = vmatpush1.bf16.msra.mxu0 0
    %679 = vmatprep.subr.bf16.mxu0 0
    %680 = vmatpush1.bf16.msra.mxu0 0
    %681 = vmatprep.subr.bf16.mxu0 0
    %682 = vmatpush1.bf16.msra.mxu0 0
    %683 = vmatprep.subr.bf16.mxu0 0
    %684 = vmatpush1.bf16.msra.mxu0 0
    %685 = vmatprep.subr.bf16.mxu0 0
    %686 = vmatpush1.bf16.msra.mxu0 %v670
    %687 = vmatprep.subr.bf16.mxu0 0
    %688 = vmatpush2.bf16.msra.mxu0 0
    %689 = vmatprep.subr.bf16.mxu0 0
    %690 = vmatpush2.bf16.msra.mxu0 0
    %691 = vmatprep.subr.bf16.mxu0 0
    %692 = vmatpush2.bf16.msra.mxu0 0
    %693 = vmatprep.subr.bf16.mxu0 0
    %694 = vmatpush2.bf16.msra.mxu0 0
    %695 = vmatprep.subr.bf16.mxu0 0
    %696 = vmatpush2.bf16.msra.mxu0 0
    %697 = vmatprep.subr.bf16.mxu0 0
    %698 = vmatpush2.bf16.msra.mxu0 0
    %699 = vmatprep.subr.bf16.mxu0 0
    %700 = vmatpush2.bf16.msra.mxu0 0
    %701 = vmatprep.subr.bf16.mxu0 0
    %702 = vmatpush2.bf16.msra.mxu0 0
    %703 = vmatprep.mubr.bf16.mxu0 0
    %704 = vmatmul.mubr.bf16.gmra.mxu0 %v100
    %v705 = vpop.f32.mrf.mxu0
    %v706 = vadd.f32 0.0, %v705
    %v707 = vpop.f32.mrf.mxu0
    %v708 = vpop.f32.mrf.mxu0
    %v709 = vpop.f32.mrf.mxu0
    %710 = vdwg.mxu0
    %v711 = vpack.c.bf16 %v706, %v706
    %s712 = scalar_lea.vmem [#allocation2], 112
    %v713 = vld [vmem:[%s712] sm:$0xf]
    %v714 = vld [vmem:[%s712 + $0x4] sm:$0xf]
    %v715 = vld [vmem:[%s712 + $0x8] sm:$0xf]
    %v716 = vld [vmem:[%s712 + $0xc] sm:$0xf]
    %v721 = vunpack.c.l.b16 %v713
    %v722 = vunpack.c.l.b16 %v714
    %v723 = vunpack.c.l.b16 %v715
    %v724 = vunpack.c.l.b16 %v716
    %v725 = vpack.c.b16 %v722, %v721
    %v726 = vpack.c.b16 %v724, %v723
    %v730 = vsel %vm219, %v711, 0
    %732 = vmatprep.subr.bf16.mxu0 0
    %733 = vmatpush1.bf16.msra.mxu0 0
    %734 = vmatprep.subr.bf16.mxu0 0
    %735 = vmatpush1.bf16.msra.mxu0 0
    %736 = vmatprep.subr.bf16.mxu0 0
    %737 = vmatpush1.bf16.msra.mxu0 0
    %738 = vmatprep.subr.bf16.mxu0 0
    %739 = vmatpush1.bf16.msra.mxu0 0
    %740 = vmatprep.subr.bf16.mxu0 0
    %741 = vmatpush1.bf16.msra.mxu0 0
    %742 = vmatprep.subr.bf16.mxu0 0
    %743 = vmatpush1.bf16.msra.mxu0 0
    %744 = vmatprep.subr.bf16.mxu0 0
    %745 = vmatpush1.bf16.msra.mxu0 %v726
    %746 = vmatprep.subr.bf16.mxu0 0
    %747 = vmatpush1.bf16.msra.mxu0 %v725
    %748 = vmatprep.subr.bf16.mxu0 0
    %749 = vmatpush2.bf16.msra.mxu0 0
    %750 = vmatprep.subr.bf16.mxu0 0
    %751 = vmatpush2.bf16.msra.mxu0 0
    %752 = vmatprep.subr.bf16.mxu0 0
    %753 = vmatpush2.bf16.msra.mxu0 0
    %754 = vmatprep.subr.bf16.mxu0 0
    %755 = vmatpush2.bf16.msra.mxu0 0
    %756 = vmatprep.subr.bf16.mxu0 0
    %757 = vmatpush2.bf16.msra.mxu0 0
    %758 = vmatprep.subr.bf16.mxu0 0
    %759 = vmatpush2.bf16.msra.mxu0 0
    %760 = vmatprep.subr.bf16.mxu0 0
    %761 = vmatpush2.bf16.msra.mxu0 0
    %762 = vmatprep.subr.bf16.mxu0 0
    %763 = vmatpush2.bf16.msra.mxu0 0
    %764 = vmatprep.mubr.bf16.mxu0 0
    %765 = vmatmul.mubr.bf16.gmra.mxu0 %v730
    %v766 = vpop.f32.mrf.mxu0
    %v767 = vadd.f32 0.0, %v766
    %v768 = vpop.f32.mrf.mxu0
    %v769 = vpop.f32.mrf.mxu0
    %v770 = vpop.f32.mrf.mxu0
    %771 = vdwg.mxu0
    %v772 = vadd.f32 %v486, %v767
    %v773 = vlaneseq
    %v774 = vshrl.u32 %v773, 7
    %v775 = vsub.s32 5, %v774
    %v776 = vrot.slane %v39, %v775
    %v777 = vadd.f32 %v772, %v776
    %v778 = vmax.f32 %v777, 0.0
    %v779 = vpack.c.bf16 %v778, %v778
    %s780 = scalar_lea.vmem [#allocation2], 128
    %v781 = vld [vmem:[%s780] sm:$0xf]
    %v782 = vld [vmem:[%s780 + $0x4] sm:$0xf]
    %v783 = vld [vmem:[%s780 + $0x8] sm:$0xf]
    %v784 = vld [vmem:[%s780 + $0xc] sm:$0xf]
    %v785 = vlaneseq
    %v786 = vshrl.u32 %v785, 7
    %v787 = vsub.s32 6, %v786
    %v788 = vrot.slane %v39, %v787
    %v793 = vunpack.c.l.b16 %v781
    %v794 = vunpack.c.l.b16 %v782
    %v795 = vunpack.c.l.b16 %v783
    %v796 = vunpack.c.l.b16 %v784
    %v797 = vpack.c.b16 %v794, %v793
    %v798 = vpack.c.b16 %v796, %v795
    %v802 = vsel %vm219, %v779, 0
    %804 = vmatprep.subr.bf16.mxu0 0
    %805 = vmatpush1.bf16.msra.mxu0 0
    %806 = vmatprep.subr.bf16.mxu0 0
    %807 = vmatpush1.bf16.msra.mxu0 0
    %808 = vmatprep.subr.bf16.mxu0 0
    %809 = vmatpush1.bf16.msra.mxu0 0
    %810 = vmatprep.subr.bf16.mxu0 0
    %811 = vmatpush1.bf16.msra.mxu0 0
    %812 = vmatprep.subr.bf16.mxu0 0
    %813 = vmatpush1.bf16.msra.mxu0 0
    %814 = vmatprep.subr.bf16.mxu0 0
    %815 = vmatpush1.bf16.msra.mxu0 0
    %816 = vmatprep.subr.bf16.mxu0 0
    %817 = vmatpush1.bf16.msra.mxu0 %v798
    %818 = vmatprep.subr.bf16.mxu0 0
    %819 = vmatpush1.bf16.msra.mxu0 %v797
    %820 = vmatprep.subr.bf16.mxu0 0
    %821 = vmatpush2.bf16.msra.mxu0 0
    %822 = vmatprep.subr.bf16.mxu0 0
    %823 = vmatpush2.bf16.msra.mxu0 0
    %824 = vmatprep.subr.bf16.mxu0 0
    %825 = vmatpush2.bf16.msra.mxu0 0
    %826 = vmatprep.subr.bf16.mxu0 0
    %827 = vmatpush2.bf16.msra.mxu0 0
    %828 = vmatprep.subr.bf16.mxu0 0
    %829 = vmatpush2.bf16.msra.mxu0 0
    %830 = vmatprep.subr.bf16.mxu0 0
    %831 = vmatpush2.bf16.msra.mxu0 0
    %832 = vmatprep.subr.bf16.mxu0 0
    %833 = vmatpush2.bf16.msra.mxu0 0
    %834 = vmatprep.subr.bf16.mxu0 0
    %835 = vmatpush2.bf16.msra.mxu0 0
    %836 = vmatprep.mubr.bf16.mxu0 0
    %837 = vmatmul.mubr.bf16.gmra.mxu0 %v802
    %v838 = vpop.f32.mrf.mxu0
    %v839 = vadd.f32 %v788, %v838
    %v840 = vpop.f32.mrf.mxu0
    %v841 = vpop.f32.mrf.mxu0
    %v842 = vpop.f32.mrf.mxu0
    %843 = vdwg.mxu0
    %844 = vst [vmem:[#allocation5] sm:$0x3] %v839
    // Predicated region
    $region26: #{tpu_custom_call.1} parent=1 // pred_check
      _
    $region27: #{tpu_custom_call.1} parent=1 // pred_check_branch
      %846 = sbr.rel (0) target = $region29
    $region28: #{tpu_custom_call.1} parent=1 // pred_region
      %s848 = ssub.s32 32, 32
      %849 = vsyncadd [#allocation4], %s848
      %s851 = sshll.u32 [#allocation5], 4
      %s852 = int_to_ptr.vmem [resolvable:$true] %s851
      %854 = dma.vmem_to_hbm [thread:$0]  %s852, 32, %s5, [#allocation4]
    $region29: #{tpu_custom_call.1} parent=1 // pred_fallthru
      _
    // Predicated region
    $region30: #{tpu_custom_call.1} parent=1 // pred_check
      _
    $region31: #{tpu_custom_call.1} parent=1 // pred_check_branch
      %856 = sbr.rel (0) target = $region33
    $region32: #{tpu_custom_call.1} parent=1 // pred_region
      %857 = dma.done [#allocation4], 32
    $region33: #{tpu_custom_call.1} parent=1 // pred_fallthru
      _
    %858 = vsyncpa [#allocation3], 1
    %859 = vsyncpa [#allocation4], 1

</llo_original>
